<compile_context>
chip_gen: v6e
topology: v6e:2x2x1
jax: 0.10.0
libtpu: 0.0.40
codegen_flags: <defaults>
</compile_context>

<pallas_src>
import functools

import jax
import jax.numpy as jnp
import numpy as np
from jax.experimental import pallas as pl
from jax.experimental.pallas import tpu as pltpu


# ----------------------------------------------------------------------------
# Kernel
# ----------------------------------------------------------------------------
def _make_kernel(split_k):
    def residual_block_kernel(x_ref, w1_ref, b1_ref, w2_ref, b2_ref, out_ref):
        # x_ref : (NB, H, W*C)   bf16 lane-dense activations (one batch tile)
        # wK_ref: (3*W*C, W*C)   block-Toeplitz conv weights, BN scale folded, bf16
        # bK_ref: (1, W*C)       folded BN bias (+ conv bias), f32
        NB, H, WC = x_ref.shape

        # Vertical-halo edge masks, built once at (1, H, 1) and broadcast.
        row = jax.lax.broadcasted_iota(jnp.int32, (1, H, 1), 1)
        not_top = jnp.where(row == 0, 0.0, 1.0)       # zero out x[h-1] at h == 0
        not_bot = jnp.where(row == H - 1, 0.0, 1.0)   # zero out x[h+1] at h == H-1

        def conv3x3(inp_f32, w_ref):
            # dy taps: sublane rolls (XLU) + edge masking; dx taps and the
            # zero padding along W live in the block-Toeplitz weights, so the
            # whole 3x3 conv is MXU matmul work only.
            up = (pltpu.roll(inp_f32, shift=1, axis=1) * not_top).astype(jnp.bfloat16)
            dn = (pltpu.roll(inp_f32, shift=H - 1, axis=1) * not_bot).astype(jnp.bfloat16)
            mid = inp_f32.astype(jnp.bfloat16)
            if split_k:
                # v5e: three accumulated (M, WC) x (WC, WC) dots. K=WC is one
                # full pass of the 128-deep MXU, so cycles match the fused
                # form while the 3*WC concat never materializes.
                out = jnp.dot(mid.reshape(NB * H, WC), w_ref[WC:2 * WC, :],
                              preferred_element_type=jnp.float32)
                out = out + jnp.dot(up.reshape(NB * H, WC), w_ref[0:WC, :],
                                    preferred_element_type=jnp.float32)
                out = out + jnp.dot(dn.reshape(NB * H, WC), w_ref[2 * WC:3 * WC, :],
                                    preferred_element_type=jnp.float32)
            else:
                # v6e/v7x: fused K = 3*WC dot (bf16 concat -> half the footprint
                # of an f32 concat + cast).
                cat = jnp.concatenate([up, mid, dn], axis=2).reshape(NB * H, 3 * WC)
                out = jnp.dot(cat, w_ref[...], preferred_element_type=jnp.float32)
            return out.reshape(NB, H, WC)

        # conv1 -> folded BN1 -> ReLU  (fed from the bf16 VMEM tile)
        y = jnp.maximum(conv3x3(x_ref[...].astype(jnp.float32), w1_ref) + b1_ref[...], 0.0)
        # conv2 -> folded BN2 -> + residual (re-read x_ref, it is VMEM-resident) -> ReLU
        z = conv3x3(y, w2_ref) + b2_ref[...] + x_ref[...].astype(jnp.float32)
        out_ref[...] = jnp.maximum(z, 0.0).astype(out_ref.dtype)

    return residual_block_kernel


# ----------------------------------------------------------------------------
# Weight folding (host side, done once)
# ----------------------------------------------------------------------------
def _toeplitz_conv_weights(w_oihw, scale, W):
    """Fold the BN scale into the conv weights and build the (3*W*C, W*C)
    block-Toeplitz matrix implementing a zero-padded 3x3 conv on rows packed
    as (H, W*C)."""
    Cout, Cin = w_oihw.shape[0], w_oihw.shape[1]
    wp = jnp.transpose(w_oihw, (2, 3, 1, 0)) * scale[None, None, None, :]  # (ky,kx,ci,co)
    kx = jnp.arange(W)[:, None] - jnp.arange(W)[None, :] + 1               # kx needed (wi, wo)
    valid = (kx >= 0) & (kx <= 2)
    taps = wp[:, jnp.clip(kx, 0, 2)]                                       # (3, wi, wo, ci, co)
    taps = jnp.where(valid[None, :, :, None, None], taps, 0.0)
    wt = jnp.transpose(taps, (0, 1, 3, 2, 4))                              # (ky, wi, ci, wo, co)
    return wt.reshape(3 * W * Cin, W * Cout)


def fold_residual_block_params(params, W, eps=1e-5):
    """Fold eval-mode BN into the Toeplitz conv weights / bias rows (run once,
    reuse across calls). Returns (w1_t, b1_r, w2_t, b2_r, split_k)."""
    (w1, cb1, g1, be1, rm1, rv1,
     w2, cb2, g2, be2, rm2, rv2) = params
    C = w1.shape[0]
    s1 = g1 / jnp.sqrt(rv1 + eps)
    b1 = (cb1 - rm1) * s1 + be1
    s2 = g2 / jnp.sqrt(rv2 + eps)
    b2 = (cb2 - rm2) * s2 + be2

    w1_t = _toeplitz_conv_weights(w1, s1, W).astype(jnp.bfloat16)   # bf16 MXU operands
    w2_t = _toeplitz_conv_weights(w2, s2, W).astype(jnp.bfloat16)
    b1_r = jnp.tile(b1, W).reshape(1, W * C).astype(jnp.float32)    # bias stays f32
    b2_r = jnp.tile(b2, W).reshape(1, W * C).astype(jnp.float32)

    kind = ""
    try:
        kind = jax.devices()[0].device_kind.lower()
    except Exception:
        pass
    split_k = "v5" in kind   # v5e/v5p: 128-deep MXU -> split-K form, no concat
    return (w1_t, b1_r, w2_t, b2_r, split_k)


# ----------------------------------------------------------------------------
# VMEM plan / tile selection (generation-aware)
# ----------------------------------------------------------------------------
def _vmem_plan():
    """Explicit VMEM limit + f32-activation-block budget.

    In-kernel live data per batch tile is roughly 6-9 block-sized f32
    temporaries plus the pipelined bf16 in/out buffers, so we budget the f32
    activation block at ~1/16 of the requested VMEM limit."""
    try:
        phys = int(pltpu.get_tpu_info().vmem_capacity_bytes)   # v5e/v6e 128 MiB, v7x 64 MiB
    except Exception:
        phys = 64 << 20                                          # conservative fallback
    vmem_limit = min(phys * 3 // 4, 96 << 20)                    # leave headroom
    act_budget = vmem_limit // 16
    return vmem_limit, act_budget


def _pick_batch_tile(N, H, WC, act_budget_bytes):
    per_img_f32 = H * WC * 4
    cap_vmem = max(1, act_budget_bytes // per_img_f32)
    rows_target = 256                                  # fill the MXU M dim (>=128 v5e, >=256 v6e/v7x)
    bt = min(cap_vmem, max(1, -(-rows_target // H)))
    if N >= 2:
        bt = min(bt, max(1, N // 2))                   # >=2 grid steps -> megacore sharding on v7x
    return max(1, min(bt, N))


# ----------------------------------------------------------------------------
# Wrappers
# ----------------------------------------------------------------------------
def residual_block_packed(x_packed, folded_params, batch_tile=None):
    """Residual block on lane-dense activations.

    x_packed: (N, H, W*C) float array (cast to bf16 for HBM traffic / MXU).
    Returns (N, H, W*C) bf16 so consecutive blocks can stay in this layout.
    """
    w1_t, b1_r, w2_t, b2_r, split_k = folded_params
    N, H, WC = x_packed.shape
    vmem_limit, act_budget = _vmem_plan()
    if batch_tile is None:
        batch_tile = _pick_batch_tile(N, H, WC, act_budget)

    # Pad N up to a multiple of the tile (no divisor search / perf cliff).
    n_pad = -(-N // batch_tile) * batch_tile
    xb = x_packed.astype(jnp.bfloat16)
    if n_pad != N:
        xb = jnp.pad(xb, ((0, n_pad - N), (0, 0), (0, 0)))

    out = pl.pallas_call(
        _make_kernel(split_k),
        out_shape=jax.ShapeDtypeStruct((n_pad, H, WC), jnp.bfloat16),
        grid_spec=pltpu.PrefetchScalarGridSpec(
            num_scalar_prefetch=0,
            grid=(n_pad // batch_tile,),
            in_specs=[
                pl.BlockSpec((batch_tile, H, WC), lambda b: (b, 0, 0)),
                pl.BlockSpec((3 * WC, WC), lambda b: (0, 0)),
                pl.BlockSpec((1, WC), lambda b: (0, 0)),
                pl.BlockSpec((3 * WC, WC), lambda b: (0, 0)),
                pl.BlockSpec((1, WC), lambda b: (0, 0)),
            ],
            out_specs=pl.BlockSpec((batch_tile, H, WC), lambda b: (b, 0, 0)),
        ),
        compiler_params=pltpu.CompilerParams(
            dimension_semantics=("parallel",),
            vmem_limit_bytes=vmem_limit,
        ),
    )(xb, w1_t, b1_r, w2_t, b2_r)

    return out[:N] if n_pad != N else out


def residual_block(x_nchw, params, eps=1e-5, batch_tile=None):
    """PyTorch-layout (NCHW) convenience wrapper. For stacks of residual
    blocks, prefer residual_block_packed to avoid repacking every block."""
    N, C, H, W = x_nchw.shape
    folded = fold_residual_block_params(params, W, eps)
    x_p = jnp.transpose(x_nchw, (0, 2, 3, 1)).reshape(N, H, W * C)
    out = residual_block_packed(x_p, folded, batch_tile=batch_tile)
    out = out.astype(x_nchw.dtype).reshape(N, H, W, C)
    return jnp.transpose(out, (0, 3, 1, 2))


# ----------------------------------------------------------------------------
# Pure-JAX reference & test harness
# ----------------------------------------------------------------------------
def residual_block_ref(x, params, eps=1e-5):
    """Pure-JAX reference (eval-mode BN), NCHW."""
    (w1, cb1, g1, be1, rm1, rv1,
     w2, cb2, g2, be2, rm2, rv2) = params

    def bn(y, g, be, rm, rv):
        return ((y - rm[None, :, None, None])
                / jnp.sqrt(rv[None, :, None, None] + eps)
                * g[None, :, None, None] + be[None, :, None, None])

    dn = ('NCHW', 'OIHW', 'NCHW')
    c1 = jax.lax.conv_general_dilated(x, w1, (1, 1), 'SAME',
                                      dimension_numbers=dn) + cb1[None, :, None, None]
    y = jax.nn.relu(bn(c1, g1, be1, rm1, rv1))
    c2 = jax.lax.conv_general_dilated(y, w2, (1, 1), 'SAME',
                                      dimension_numbers=dn) + cb2[None, :, None, None]
    z = bn(c2, g2, be2, rm2, rv2) + x
    return jax.nn.relu(z)


def make_params(key, C):
    ks = jax.random.split(key, 12)
    w1 = 0.1 * jax.random.normal(ks[0], (C, C, 3, 3), jnp.float32)
    cb1 = 0.1 * jax.random.normal(ks[1], (C,), jnp.float32)
    g1 = 1.0 + 0.1 * jax.random.normal(ks[2], (C,), jnp.float32)
    be1 = 0.1 * jax.random.normal(ks[3], (C,), jnp.float32)
    rm1 = 0.1 * jax.random.normal(ks[4], (C,), jnp.float32)
    rv1 = jnp.abs(jax.random.normal(ks[5], (C,), jnp.float32)) + 0.5
    w2 = 0.1 * jax.random.normal(ks[6], (C, C, 3, 3), jnp.float32)
    cb2 = 0.1 * jax.random.normal(ks[7], (C,), jnp.float32)
    g2 = 1.0 + 0.1 * jax.random.normal(ks[8], (C,), jnp.float32)
    be2 = 0.1 * jax.random.normal(ks[9], (C,), jnp.float32)
    rm2 = 0.1 * jax.random.normal(ks[10], (C,), jnp.float32)
    rv2 = jnp.abs(jax.random.normal(ks[11], (C,), jnp.float32)) + 0.5
    return (w1, cb1, g1, be1, rm1, rv1, w2, cb2, g2, be2, rm2, rv2)


if __name__ == "__main__":
    # Chess-board-ish shapes (NCHW like PyTorch): W*C = 128 -> fully lane-dense.
    N, C, H, W = 2, 16, 8, 8
    key = jax.random.PRNGKey(0)
    kx, kp = jax.random.split(key)
    x = jax.random.normal(kx, (N, C, H, W), jnp.float32)
    params = make_params(kp, C)

    out = jax.block_until_ready(residual_block(x, params))
    ref = jax.block_until_ready(residual_block_ref(x, params))

    # bf16 activations/weights on the MXU + bf16 HBM I/O vs. f32 reference:
    # relative agreement ~0.5-1%; atol loosened for values straddling the
    # ReLU boundary.
    np.testing.assert_allclose(np.asarray(out), np.asarray(ref), rtol=2e-2, atol=5e-2)
    assert out.shape == (N, C, H, W) and out.dtype == jnp.float32
    print("KERNEL_OK")
</pallas_src>

<mosaic_0001>
module attributes {stable_mosaic.version = 11 : i64} {
  func.func @residual_block_kernel(%arg0: i32, %arg1: memref<1x8x128xbf16, #tpu.memory_space<vmem>>, %arg2: memref<384x128xbf16, #tpu.memory_space<vmem>>, %arg3: memref<1x128xf32, #tpu.memory_space<vmem>>, %arg4: memref<384x128xbf16, #tpu.memory_space<vmem>>, %arg5: memref<1x128xf32, #tpu.memory_space<vmem>>, %arg6: memref<1x8x128xbf16, #tpu.memory_space<vmem>>) attributes {dimension_semantics = [#tpu.dimension_semantics<parallel>], iteration_bounds = array<i64: 2>, scalar_prefetch = 0 : i64, scratch_operands = 0 : i64, tpu.core_type = #tpu.core_type<tc>, window_params = [{transform_indices = @transform_0, window_bounds = array<i64: 1, 8, 128>}, {pipeline_mode = #tpu.pipeline_mode<synchronous>, transform_indices = @transform_1, window_bounds = array<i64: 384, 128>}, {pipeline_mode = #tpu.pipeline_mode<synchronous>, transform_indices = @transform_2, window_bounds = array<i64: 1, 128>}, {pipeline_mode = #tpu.pipeline_mode<synchronous>, transform_indices = @transform_3, window_bounds = array<i64: 384, 128>}, {pipeline_mode = #tpu.pipeline_mode<synchronous>, transform_indices = @transform_4, window_bounds = array<i64: 1, 128>}, {transform_indices = @transform_5, window_bounds = array<i64: 1, 8, 128>}]} {
    %0 = tpu.iota {dimensions = array<i32: 1>} : vector<1x8x1xi32>
    %c0_i32 = arith.constant 0 : i32
    %1 = vector.broadcast %c0_i32 : i32 to vector<1x8x1xi32>
    %2 = arith.cmpi eq, %0, %1 : vector<1x8x1xi32>
    %cst = arith.constant 0.000000e+00 : f32
    %cst_0 = arith.constant 1.000000e+00 : f32
    %3 = vector.broadcast %cst : f32 to vector<1x8x1xf32>
    %4 = vector.broadcast %cst_0 : f32 to vector<1x8x1xf32>
    %5 = arith.select %2, %3, %4 : vector<1x8x1xi1>, vector<1x8x1xf32>
    %c7_i32 = arith.constant 7 : i32
    %6 = vector.broadcast %c7_i32 : i32 to vector<1x8x1xi32>
    %7 = arith.cmpi eq, %0, %6 : vector<1x8x1xi32>
    %cst_1 = arith.constant 0.000000e+00 : f32
    %cst_2 = arith.constant 1.000000e+00 : f32
    %8 = vector.broadcast %cst_1 : f32 to vector<1x8x1xf32>
    %9 = vector.broadcast %cst_2 : f32 to vector<1x8x1xf32>
    %10 = arith.select %7, %8, %9 : vector<1x8x1xi1>, vector<1x8x1xf32>
    %c0 = arith.constant 0 : index
    %c0_3 = arith.constant 0 : index
    %c0_4 = arith.constant 0 : index
    %11 = vector.load %arg1[%c0, %c0_3, %c0_4] : memref<1x8x128xbf16, #tpu.memory_space<vmem>>, vector<1x8x128xbf16>
    %12 = arith.extf %11 : vector<1x8x128xbf16> to vector<1x8x128xf32>
    %c1_i32 = arith.constant 1 : i32
    %13 = tpu.dynamic_rotate %12 by %c1_i32 dim 1 : vector<1x8x128xf32>, i32 -> vector<1x8x128xf32>
    %14 = vector.broadcast %5 : vector<1x8x1xf32> to vector<1x8x128xf32>
    %15 = arith.mulf %13, %14 : vector<1x8x128xf32>
    %16 = arith.truncf %15 : vector<1x8x128xf32> to vector<1x8x128xbf16>
    %c7_i32_5 = arith.constant 7 : i32
    %17 = tpu.dynamic_rotate %12 by %c7_i32_5 dim 1 : vector<1x8x128xf32>, i32 -> vector<1x8x128xf32>
    %18 = vector.broadcast %10 : vector<1x8x1xf32> to vector<1x8x128xf32>
    %19 = arith.mulf %17, %18 : vector<1x8x128xf32>
    %20 = arith.truncf %19 : vector<1x8x128xf32> to vector<1x8x128xbf16>
    %21 = arith.truncf %12 : vector<1x8x128xf32> to vector<1x8x128xbf16>
    %22 = tpu.concatenate %16, %21, %20 in 2 : vector<1x8x128xbf16>, vector<1x8x128xbf16>, vector<1x8x128xbf16> -> vector<1x8x384xbf16>
    %23 = vector.shape_cast %22 : vector<1x8x384xbf16> to vector<8x384xbf16>
    %c0_6 = arith.constant 0 : index
    %c0_7 = arith.constant 0 : index
    %24 = vector.load %arg2[%c0_6, %c0_7] : memref<384x128xbf16, #tpu.memory_space<vmem>>, vector<384x128xbf16>
    %cst_8 = arith.constant dense<0.000000e+00> : vector<8x128xf32>
    %25 = tpu.matmul %23, %24, %cst_8 {dimension_numbers = #tpu.dot_dimension_numbers<[1], [0], [0], [1], [0, 0, 1, 1], [], []>} : vector<8x384xbf16>, vector<384x128xbf16>, vector<8x128xf32> -> vector<8x128xf32>
    %26 = vector.shape_cast %25 : vector<8x128xf32> to vector<1x8x128xf32>
    %c0_9 = arith.constant 0 : index
    %c0_10 = arith.constant 0 : index
    %27 = vector.load %arg3[%c0_9, %c0_10] : memref<1x128xf32, #tpu.memory_space<vmem>>, vector<1x128xf32>
    %28 = vector.shape_cast %27 : vector<1x128xf32> to vector<1x1x128xf32>
    %29 = vector.broadcast %28 : vector<1x1x128xf32> to vector<1x8x128xf32>
    %30 = arith.addf %26, %29 : vector<1x8x128xf32>
    %cst_11 = arith.constant 0.000000e+00 : f32
    %31 = vector.broadcast %cst_11 : f32 to vector<1x8x128xf32>
    %32 = arith.maximumf %30, %31 : vector<1x8x128xf32>
    %c1_i32_12 = arith.constant 1 : i32
    %33 = tpu.dynamic_rotate %32 by %c1_i32_12 dim 1 : vector<1x8x128xf32>, i32 -> vector<1x8x128xf32>
    %34 = vector.broadcast %5 : vector<1x8x1xf32> to vector<1x8x128xf32>
    %35 = arith.mulf %33, %34 : vector<1x8x128xf32>
    %36 = arith.truncf %35 : vector<1x8x128xf32> to vector<1x8x128xbf16>
    %c7_i32_13 = arith.constant 7 : i32
    %37 = tpu.dynamic_rotate %32 by %c7_i32_13 dim 1 : vector<1x8x128xf32>, i32 -> vector<1x8x128xf32>
    %38 = vector.broadcast %10 : vector<1x8x1xf32> to vector<1x8x128xf32>
    %39 = arith.mulf %37, %38 : vector<1x8x128xf32>
    %40 = arith.truncf %39 : vector<1x8x128xf32> to vector<1x8x128xbf16>
    %41 = arith.truncf %32 : vector<1x8x128xf32> to vector<1x8x128xbf16>
    %42 = tpu.concatenate %36, %41, %40 in 2 : vector<1x8x128xbf16>, vector<1x8x128xbf16>, vector<1x8x128xbf16> -> vector<1x8x384xbf16>
    %43 = vector.shape_cast %42 : vector<1x8x384xbf16> to vector<8x384xbf16>
    %c0_14 = arith.constant 0 : index
    %c0_15 = arith.constant 0 : index
    %44 = vector.load %arg4[%c0_14, %c0_15] : memref<384x128xbf16, #tpu.memory_space<vmem>>, vector<384x128xbf16>
    %cst_16 = arith.constant dense<0.000000e+00> : vector<8x128xf32>
    %45 = tpu.matmul %43, %44, %cst_16 {dimension_numbers = #tpu.dot_dimension_numbers<[1], [0], [0], [1], [0, 0, 1, 1], [], []>} : vector<8x384xbf16>, vector<384x128xbf16>, vector<8x128xf32> -> vector<8x128xf32>
    %46 = vector.shape_cast %45 : vector<8x128xf32> to vector<1x8x128xf32>
    %c0_17 = arith.constant 0 : index
    %c0_18 = arith.constant 0 : index
    %47 = vector.load %arg5[%c0_17, %c0_18] : memref<1x128xf32, #tpu.memory_space<vmem>>, vector<1x128xf32>
    %48 = vector.shape_cast %47 : vector<1x128xf32> to vector<1x1x128xf32>
    %49 = vector.broadcast %48 : vector<1x1x128xf32> to vector<1x8x128xf32>
    %50 = arith.addf %46, %49 : vector<1x8x128xf32>
    %c0_19 = arith.constant 0 : index
    %c0_20 = arith.constant 0 : index
    %c0_21 = arith.constant 0 : index
    %51 = vector.load %arg1[%c0_19, %c0_20, %c0_21] : memref<1x8x128xbf16, #tpu.memory_space<vmem>>, vector<1x8x128xbf16>
    %52 = arith.extf %51 : vector<1x8x128xbf16> to vector<1x8x128xf32>
    %53 = arith.addf %50, %52 : vector<1x8x128xf32>
    %cst_22 = arith.constant 0.000000e+00 : f32
    %54 = vector.broadcast %cst_22 : f32 to vector<1x8x128xf32>
    %55 = arith.maximumf %53, %54 : vector<1x8x128xf32>
    %56 = arith.truncf %55 : vector<1x8x128xf32> to vector<1x8x128xbf16>
    %c0_23 = arith.constant 0 : index
    %c0_24 = arith.constant 0 : index
    %c0_25 = arith.constant 0 : index
    %57 = vector.load %arg6[%c0_23, %c0_24, %c0_25] : memref<1x8x128xbf16, #tpu.memory_space<vmem>>, vector<1x8x128xbf16>
    tpu.vector_store %arg6[%c0_23, %c0_24, %c0_25], %56 {strides = array<i32>} : memref<1x8x128xbf16, #tpu.memory_space<vmem>>, vector<1x8x128xbf16>,
    return
  }
  func.func @transform_0(%arg0: i32) -> (i32, i32, i32) {
    %c0_i32 = arith.constant 0 : i32
    %c0_i32_0 = arith.constant 0 : i32
    %c0_i32_1 = arith.constant 0 : i32
    return %arg0, %c0_i32, %c0_i32_0 : i32, i32, i32
  }
  func.func @transform_1(%arg0: i32) -> (i32, i32) {
    %c0_i32 = arith.constant 0 : i32
    %c0_i32_0 = arith.constant 0 : i32
    %c0_i32_1 = arith.constant 0 : i32
    return %c0_i32, %c0_i32_0 : i32, i32
  }
  func.func @transform_2(%arg0: i32) -> (i32, i32) {
    %c0_i32 = arith.constant 0 : i32
    %c0_i32_0 = arith.constant 0 : i32
    %c0_i32_1 = arith.constant 0 : i32
    return %c0_i32, %c0_i32_0 : i32, i32
  }
  func.func @transform_3(%arg0: i32) -> (i32, i32) {
    %c0_i32 = arith.constant 0 : i32
    %c0_i32_0 = arith.constant 0 : i32
    %c0_i32_1 = arith.constant 0 : i32
    return %c0_i32, %c0_i32_0 : i32, i32
  }
  func.func @transform_4(%arg0: i32) -> (i32, i32) {
    %c0_i32 = arith.constant 0 : i32
    %c0_i32_0 = arith.constant 0 : i32
    %c0_i32_1 = arith.constant 0 : i32
    return %c0_i32, %c0_i32_0 : i32, i32
  }
  func.func @transform_5(%arg0: i32) -> (i32, i32, i32) {
    %c0_i32 = arith.constant 0 : i32
    %c0_i32_0 = arith.constant 0 : i32
    %c0_i32_1 = arith.constant 0 : i32
    return %arg0, %c0_i32, %c0_i32_0 : i32, i32, i32
  }
}

</mosaic_0001>

<llo_original>
// kernel: tpu_custom_call.1
$region0: #{tpu_custom_call.1}
  #allocation0 [shape = 'u32[]', space=smem, size = 0x4, offset = 0x4, fixed_abs, tag = 'smem constant byte address 0x4 - core index']
  #allocation1 [shape = 'u32[144,128]{1,0:T(1,128)}', space=vmem, size = 0x12000, scoped, tag = 'internal scratch']
  %s0 = inlined_call_operand.hbm [shape: bf16[2,8,128], index: 0, kind: input, shape index: {}]
  %s1 = inlined_call_operand.hbm [shape: bf16[384,128], index: 1, kind: input, shape index: {}]
  %s2 = inlined_call_operand.vmem [shape: f32[1,128], index: 2, kind: input, shape index: {}]
  %s3 = inlined_call_operand.hbm [shape: bf16[384,128], index: 3, kind: input, shape index: {}]
  %s4 = inlined_call_operand.vmem [shape: f32[1,128], index: 4, kind: input, shape index: {}]
  %s5 = inlined_call_operand.hbm [shape: bf16[2,8,128], index: 5, kind: output, shape index: {}]
  %s6 = sld [smem:[#allocation0]]
  $region65: #{tpu_custom_call.1} parent=0
    _
  %s8 = ssub.s32 1, %s6
  %s9 = scalar_select 0, %s8, %s6
  $region1: #{tpu_custom_call.1} parent=0
    #allocation2 [shape = 'u8[4096]{0}', space=vmem, size = 0x1000, scoped, tag = 'input window, operand 0']
    #allocation3 [shape = 's32[2]{0}', space=sflag, size = 0x8, scoped, tag = 'scoped memory for tpu_custom_call.1']
    #allocation4 [shape = 's32[2]{0}', space=sflag, size = 0x8, scoped, tag = 'scoped memory for tpu_custom_call.1']
    #allocation5 [shape = 'u8[98304]{0}', space=vmem, size = 0x18000, scoped, tag = 'input window, operand 1, single buffered']
    #allocation6 [shape = 's32[1]{0}', space=sflag, size = 0x4, scoped, tag = 'scoped memory for tpu_custom_call.1']
    #allocation7 [shape = 'u8[98304]{0}', space=vmem, size = 0x18000, scoped, tag = 'input window, operand 3, single buffered']
    #allocation8 [shape = 'u8[4096]{0}', space=vmem, size = 0x1000, scoped, tag = 'output window, operand 0']
    %10 = vsyncpa [#allocation3], 0
    %s11 = scalar_lea.sflag [#allocation3], 1
    %12 = vsyncpa %s11, 0
    %13 = vsyncpa [#allocation6], 0
    %14 = vsyncpa [#allocation4], 0
    %s15 = scalar_lea.sflag [#allocation4], 1
    %16 = vsyncpa %s15, 0
    loop: start=0, step=1, limit=4
    $region2: #{tpu_custom_call.1} parent=1 // loop_pre_header
      _
    $region3: #{tpu_custom_call.1} parent=1 // loop_header
      %s18 = sphi 0, %s22
      %p19 = scmp.ge.s32.totalorder %s18, 4
      %s28 = sphi 0, %s30
      %s31 = sphi 0, %s28
      %s32 = sphi 0, %s31
      %s48 = sphi 0, %s32
      %s52 = sphi 0, %s52
      %s54 = sphi 0, %s52
      %s55 = sphi 0, %s54
      %s69 = sphi 0, %s55
      %s73 = sphi 0, %s73
      %s75 = sphi 0, %s73
      %s76 = sphi 0, %s75
      %s90 = sphi 0, %s76
      %s94 = sphi 0, %s94
      %s96 = sphi 0, %s94
      %s97 = sphi 0, %s96
      %s111 = sphi 0, %s97
      %s115 = sphi 0, %s115
      %s117 = sphi 0, %s115
      %s118 = sphi 0, %s117
      %s132 = sphi 0, %s118
      %s138 = sphi 0, %s140
      %s141 = sphi 0, %s138
      %s142 = sphi 0, %s141
      %s158 = sphi 0, %s142
    $region4: #{tpu_custom_call.1} parent=1 // loop_header_branch
      %21 = sbr.rel (%p19) target = $region8
    $region5: #{tpu_custom_call.1} parent=1 // loop_body
      %s23 = ssub.s32 %s18, 1
      %s24 = ssub.s32 %s18, 2
      %s25 = sadd.s32 %s18, 1
      %s26 = ssub.s32 %s18, %s25
      %p27 = scmp.eq.s32.totalorder %s26, 0
      %s29 = sadd.s32 %s28, 1
      %s30 = scalar_select %p27, %s28, %s29
      %p33 = pneg %p27
      %p34 = scmp.eq.s32.totalorder %s18, 1
      %p35 = por %p33, %p34
      %p36 = scmp.ne.s32.totalorder %s28, %s31
      %p37 = scmp.eq.s32.totalorder %s18, 0
      %p38 = por %p36, %p37
      %p39 = scmp.ne.s32.totalorder %s28, %s31
      %p40 = scmp.eq.s32.totalorder %s23, 1
      %p41 = por %p39, %p40
      %p42 = scmp.ne.s32.totalorder %s31, %s32
      %p43 = scmp.eq.s32.totalorder %s23, 0
      %p44 = por %p42, %p43
      %p45 = scmp.ne.s32.totalorder %s31, %s32
      %p46 = scmp.eq.s32.totalorder %s24, 1
      %p47 = por %p45, %p46
      %p49 = scmp.ne.s32.totalorder %s32, %s48
      %p50 = scmp.eq.s32.totalorder %s24, 0
      %p51 = por %p49, %p50
      %s53 = sadd.s32 %s52, 1
      %p56 = scmp.eq.s32.totalorder %s18, 1
      %p57 = scmp.ne.s32.totalorder %s52, %s54
      %p58 = scmp.eq.s32.totalorder %s18, 0
      %p59 = por %p57, %p58
      %p60 = scmp.ne.s32.totalorder %s52, %s54
      %p61 = scmp.eq.s32.totalorder %s23, 1
      %p62 = por %p60, %p61
      %p63 = scmp.ne.s32.totalorder %s54, %s55
      %p64 = scmp.eq.s32.totalorder %s23, 0
      %p65 = por %p63, %p64
      %p66 = scmp.ne.s32.totalorder %s54, %s55
      %p67 = scmp.eq.s32.totalorder %s24, 1
      %p68 = por %p66, %p67
      %p70 = scmp.ne.s32.totalorder %s55, %s69
      %p71 = scmp.eq.s32.totalorder %s24, 0
      %p72 = por %p70, %p71
      %s74 = sadd.s32 %s73, 1
      %p77 = scmp.eq.s32.totalorder %s18, 1
      %p78 = scmp.ne.s32.totalorder %s73, %s75
      %p79 = scmp.eq.s32.totalorder %s18, 0
      %p80 = por %p78, %p79
      %p81 = scmp.ne.s32.totalorder %s73, %s75
      %p82 = scmp.eq.s32.totalorder %s23, 1
      %p83 = por %p81, %p82
      %p84 = scmp.ne.s32.totalorder %s75, %s76
      %p85 = scmp.eq.s32.totalorder %s23, 0
      %p86 = por %p84, %p85
      %p87 = scmp.ne.s32.totalorder %s75, %s76
      %p88 = scmp.eq.s32.totalorder %s24, 1
      %p89 = por %p87, %p88
      %p91 = scmp.ne.s32.totalorder %s76, %s90
      %p92 = scmp.eq.s32.totalorder %s24, 0
      %p93 = por %p91, %p92
      %s95 = sadd.s32 %s94, 1
      %p98 = scmp.eq.s32.totalorder %s18, 1
      %p99 = scmp.ne.s32.totalorder %s94, %s96
      %p100 = scmp.eq.s32.totalorder %s18, 0
      %p101 = por %p99, %p100
      %p102 = scmp.ne.s32.totalorder %s94, %s96
      %p103 = scmp.eq.s32.totalorder %s23, 1
      %p104 = por %p102, %p103
      %p105 = scmp.ne.s32.totalorder %s96, %s97
      %p106 = scmp.eq.s32.totalorder %s23, 0
      %p107 = por %p105, %p106
      %p108 = scmp.ne.s32.totalorder %s96, %s97
      %p109 = scmp.eq.s32.totalorder %s24, 1
      %p110 = por %p108, %p109
      %p112 = scmp.ne.s32.totalorder %s97, %s111
      %p113 = scmp.eq.s32.totalorder %s24, 0
      %p114 = por %p112, %p113
      %s116 = sadd.s32 %s115, 1
      %p119 = scmp.eq.s32.totalorder %s18, 1
      %p120 = scmp.ne.s32.totalorder %s115, %s117
      %p121 = scmp.eq.s32.totalorder %s18, 0
      %p122 = por %p120, %p121
      %p123 = scmp.ne.s32.totalorder %s115, %s117
      %p124 = scmp.eq.s32.totalorder %s23, 1
      %p125 = por %p123, %p124
      %p126 = scmp.ne.s32.totalorder %s117, %s118
      %p127 = scmp.eq.s32.totalorder %s23, 0
      %p128 = por %p126, %p127
      %p129 = scmp.ne.s32.totalorder %s117, %s118
      %p130 = scmp.eq.s32.totalorder %s24, 1
      %p131 = por %p129, %p130
      %p133 = scmp.ne.s32.totalorder %s118, %s132
      %p134 = scmp.eq.s32.totalorder %s24, 0
      %p135 = por %p133, %p134
      %s136 = ssub.s32 %s18, %s25
      %p137 = scmp.eq.s32.totalorder %s136, 0
      %s139 = sadd.s32 %s138, 1
      %s140 = scalar_select %p137, %s138, %s139
      %p143 = pneg %p137
      %p144 = scmp.eq.s32.totalorder %s18, 1
      %p145 = por %p143, %p144
      %p146 = scmp.ne.s32.totalorder %s138, %s141
      %p147 = scmp.eq.s32.totalorder %s18, 0
      %p148 = por %p146, %p147
      %p149 = scmp.ne.s32.totalorder %s138, %s141
      %p150 = scmp.eq.s32.totalorder %s23, 1
      %p151 = por %p149, %p150
      %p152 = scmp.ne.s32.totalorder %s141, %s142
      %p153 = scmp.eq.s32.totalorder %s23, 0
      %p154 = por %p152, %p153
      %p155 = scmp.ne.s32.totalorder %s141, %s142
      %p156 = scmp.eq.s32.totalorder %s24, 1
      %p157 = por %p155, %p156
      %p159 = scmp.ne.s32.totalorder %s142, %s158
      %p160 = scmp.eq.s32.totalorder %s24, 0
      %p161 = por %p159, %p160
      %p162 = scmp.le.s32.totalorder 1, %s18
      %p163 = scmp.lt.s32.totalorder %s18, 3
      %p164 = pnand %p162, %p163
      %p165 = pneg %p164
      // Predicated region
      $region9: #{tpu_custom_call.1} parent=5 // pred_check
        _
      $region10: #{tpu_custom_call.1} parent=5 // pred_check_branch
        %167 = sbr.rel (%p164) target = $region12
      $region11: #{tpu_custom_call.1} parent=5 // pred_region
        %s168 = ssub.s32 %s18, 1
        // Predicated region
        $region13: #{tpu_custom_call.1} parent=11 // pred_check
          %p169 = pneg %p65
        $region14: #{tpu_custom_call.1} parent=11 // pred_check_branch
          %171 = sbr.rel (%p169) target = $region16
        $region15: #{tpu_custom_call.1} parent=11 // pred_region
          %s173 = ssub.s32 3072, 3072
          %174 = vsyncadd [#allocation6], %s173
          %s175 = sshll.u32 [#allocation5], 4
          %s176 = int_to_ptr.vmem [resolvable:$true] %s175
          %181 = dma.hbm_to_vmem [thread:$0]  %s1, 3072, %s176, [#allocation6], 64, 64, 4
        $region16: #{tpu_custom_call.1} parent=11 // pred_fallthru
          _
        // Predicated region
        $region17: #{tpu_custom_call.1} parent=11 // pred_check
          %p182 = pneg %p86
        $region18: #{tpu_custom_call.1} parent=11 // pred_check_branch
          %184 = sbr.rel (%p182) target = $region20
        $region19: #{tpu_custom_call.1} parent=11 // pred_region
          _
        $region20: #{tpu_custom_call.1} parent=11 // pred_fallthru
          _
        // Predicated region
        $region21: #{tpu_custom_call.1} parent=11 // pred_check
          %p185 = pneg %p107
        $region22: #{tpu_custom_call.1} parent=11 // pred_check_branch
          %187 = sbr.rel (%p185) target = $region24
        $region23: #{tpu_custom_call.1} parent=11 // pred_region
          %s189 = ssub.s32 3072, 3072
          %190 = vsyncadd [#allocation6], %s189
          %s191 = sshll.u32 [#allocation7], 4
          %s192 = int_to_ptr.vmem [resolvable:$true] %s191
          %197 = dma.hbm_to_vmem [thread:$0]  %s3, 3072, %s192, [#allocation6], 64, 64, 4
        $region24: #{tpu_custom_call.1} parent=11 // pred_fallthru
          _
        // Predicated region
        $region25: #{tpu_custom_call.1} parent=11 // pred_check
          %p198 = pneg %p128
        $region26: #{tpu_custom_call.1} parent=11 // pred_check_branch
          %200 = sbr.rel (%p198) target = $region28
        $region27: #{tpu_custom_call.1} parent=11 // pred_region
          _
        $region28: #{tpu_custom_call.1} parent=11 // pred_fallthru
          _
      $region12: #{tpu_custom_call.1} parent=5 // pred_fallthru
        _
      %p201 = scmp.lt.s32.totalorder %s18, 2
      // Predicated region
      $region29: #{tpu_custom_call.1} parent=5 // pred_check
        %p202 = pneg %p201
      $region30: #{tpu_custom_call.1} parent=5 // pred_check_branch
        %204 = sbr.rel (%p202) target = $region32
      $region31: #{tpu_custom_call.1} parent=5 // pred_region
        // Predicated region
        $region33: #{tpu_custom_call.1} parent=31 // pred_check
          %p205 = pneg %p38
        $region34: #{tpu_custom_call.1} parent=31 // pred_check_branch
          %207 = sbr.rel (%p205) target = $region36
        $region35: #{tpu_custom_call.1} parent=31 // pred_region
          %s208 = sand.u32 %s28, 1
          %s209 = scalar_lea.sflag [#allocation3], %s208
          %s210 = sand.u32 %s28, 1
          %s211 = smul.addr %s210, 4
          %s212 = scalar_lea.vmem [#allocation2], %s211
          %s214 = ssub.s32 64, 64
          %215 = vsyncadd %s209, %s214
          %s216 = smul.addr %s18, 64
          %s217 = scalar_lea.hbm %s0, %s216
          %s219 = sshll.u32 %s212, 4
          %s220 = int_to_ptr.vmem [resolvable:$true] %s219
          %222 = dma.hbm_to_vmem [thread:$0]  %s217, 64, %s220, %s209
        $region36: #{tpu_custom_call.1} parent=31 // pred_fallthru
          _
      $region32: #{tpu_custom_call.1} parent=5 // pred_fallthru
        _
      %p223 = scmp.le.s32.totalorder 1, %s18
      %p224 = scmp.lt.s32.totalorder %s18, 3
      %p225 = pnand %p223, %p224
      %p226 = pneg %p225
      // Predicated region
      $region37: #{tpu_custom_call.1} parent=5 // pred_check
        _
      $region38: #{tpu_custom_call.1} parent=5 // pred_check_branch
        %228 = sbr.rel (%p225) target = $region40
      $region39: #{tpu_custom_call.1} parent=5 // pred_region
        %s229 = ssub.s32 %s18, 1
        %s230 = sand.u32 %s31, 1
        %s231 = scalar_lea.sflag [#allocation3], %s230
        %s232 = sand.u32 %s31, 1
        %s233 = smul.addr %s232, 4
        %s234 = scalar_lea.vmem [#allocation2], %s233
        // Predicated region
        $region41: #{tpu_custom_call.1} parent=39 // pred_check
          %p235 = pneg %p44
        $region42: #{tpu_custom_call.1} parent=39 // pred_check_branch
          %237 = sbr.rel (%p235) target = $region44
        $region43: #{tpu_custom_call.1} parent=39 // pred_region
          %238 = dma.done %s231, 64
        $region44: #{tpu_custom_call.1} parent=39 // pred_fallthru
          _
        // Predicated region
        $region45: #{tpu_custom_call.1} parent=39 // pred_check
          %p239 = pneg %p65
        $region46: #{tpu_custom_call.1} parent=39 // pred_check_branch
          %241 = sbr.rel (%p239) target = $region48
        $region47: #{tpu_custom_call.1} parent=39 // pred_region
          %242 = dma.done [#allocation6], 3072
        $region48: #{tpu_custom_call.1} parent=39 // pred_fallthru
          _
        // Predicated region
        $region49: #{tpu_custom_call.1} parent=39 // pred_check
          %p243 = pneg %p107
        $region50: #{tpu_custom_call.1} parent=39 // pred_check_branch
          %245 = sbr.rel (%p243) target = $region52
        $region51: #{tpu_custom_call.1} parent=39 // pred_region
          %246 = dma.done [#allocation6], 3072
        $region52: #{tpu_custom_call.1} parent=39 // pred_fallthru
          _
        %s247 = sand.u32 %s31, 1
        %s248 = scalar_lea.sflag [#allocation3], %s247
        %s249 = sand.u32 %s31, 1
        %s250 = smul.addr %s249, 4
        %s251 = scalar_lea.vmem [#allocation2], %s250
        %p252 = pneg %p44
        %p253 = pneg %p41
        %p254 = pneg %p65
        %p255 = pneg %p62
        %p256 = pneg %p86
        %p257 = pneg %p83
        %p258 = pneg %p107
        %p259 = pneg %p104
        %p260 = pneg %p128
        %p261 = pneg %p125
        %p262 = pneg %p154
        %p263 = pneg %p151
        %s264 = sand.u32 %s141, 1
        %s265 = scalar_lea.sflag [#allocation4], %s264
        %s266 = sand.u32 %s141, 1
        %s267 = smul.addr %s266, 4
        %s268 = scalar_lea.vmem [#allocation8], %s267
        %v270 = vlaneseq
        %v271 = vshrl.u32 %v270, 7
        %vm272 = vcmp.eq.s32.totalorder %v271, 0
        %v273 = vsel %vm272, 0.0, 1.0
        %vm274 = vcmp.eq.s32.totalorder %v271, 7
        %v275 = vsel %vm274, 0.0, 1.0
        %v276 = vld [vmem:[%s234] sm:$0xf]
        %v277 = vunpack.c.l.bf16 %v276
        %v278 = vrot.slane %v277, 7
        %v279 = vmul.f32 %v278, %v273
        %v280 = vpack.c.bf16 %v279, %v279
        %v281 = vrot.slane %v277, 1
        %v282 = vmul.f32 %v281, %v275
        %v283 = vpack.c.bf16 %v282, %v282
        %v284 = vld [vmem:[#allocation5] sm:$0xf]
        %v285 = vld [vmem:[#allocation5 + $0x4] sm:$0xf]
        %v286 = vld [vmem:[#allocation5 + $0x8] sm:$0xf]
        %v287 = vld [vmem:[#allocation5 + $0xc] sm:$0xf]
        %v288 = vld [vmem:[#allocation5 + $0x10] sm:$0xf]
        %v289 = vld [vmem:[#allocation5 + $0x14] sm:$0xf]
        %v290 = vld [vmem:[#allocation5 + $0x18] sm:$0xf]
        %v291 = vld [vmem:[#allocation5 + $0x1c] sm:$0xf]
        %v292 = vld [vmem:[#allocation5 + $0x20] sm:$0xf]
        %v293 = vld [vmem:[#allocation5 + $0x24] sm:$0xf]
        %v294 = vld [vmem:[#allocation5 + $0x28] sm:$0xf]
        %v295 = vld [vmem:[#allocation5 + $0x2c] sm:$0xf]
        %v296 = vld [vmem:[#allocation5 + $0x30] sm:$0xf]
        %v297 = vld [vmem:[#allocation5 + $0x34] sm:$0xf]
        %v298 = vld [vmem:[#allocation5 + $0x38] sm:$0xf]
        %v299 = vld [vmem:[#allocation5 + $0x3c] sm:$0xf]
        %v300 = vld [vmem:[#allocation5 + $0x40] sm:$0xf]
        %v301 = vld [vmem:[#allocation5 + $0x44] sm:$0xf]
        %v302 = vld [vmem:[#allocation5 + $0x48] sm:$0xf]
        %v303 = vld [vmem:[#allocation5 + $0x4c] sm:$0xf]
        %v304 = vld [vmem:[#allocation5 + $0x50] sm:$0xf]
        %v305 = vld [vmem:[#allocation5 + $0x54] sm:$0xf]
        %v306 = vld [vmem:[#allocation5 + $0x58] sm:$0xf]
        %v307 = vld [vmem:[#allocation5 + $0x5c] sm:$0xf]
        %v308 = vld [vmem:[#allocation5 + $0x60] sm:$0xf]
        %v309 = vld [vmem:[#allocation5 + $0x64] sm:$0xf]
        %v310 = vld [vmem:[#allocation5 + $0x68] sm:$0xf]
        %v311 = vld [vmem:[#allocation5 + $0x6c] sm:$0xf]
        %v312 = vld [vmem:[#allocation5 + $0x70] sm:$0xf]
        %v313 = vld [vmem:[#allocation5 + $0x74] sm:$0xf]
        %v314 = vld [vmem:[#allocation5 + $0x78] sm:$0xf]
        %v315 = vld [vmem:[#allocation5 + $0x7c] sm:$0xf]
        %v316 = vld [vmem:[#allocation5 + $0x80] sm:$0xf]
        %v317 = vld [vmem:[#allocation5 + $0x84] sm:$0xf]
        %v318 = vld [vmem:[#allocation5 + $0x88] sm:$0xf]
        %v319 = vld [vmem:[#allocation5 + $0x8c] sm:$0xf]
        %v320 = vld [vmem:[#allocation5 + $0x90] sm:$0xf]
        %v321 = vld [vmem:[#allocation5 + $0x94] sm:$0xf]
        %v322 = vld [vmem:[#allocation5 + $0x98] sm:$0xf]
        %v323 = vld [vmem:[#allocation5 + $0x9c] sm:$0xf]
        %v324 = vld [vmem:[#allocation5 + $0xa0] sm:$0xf]
        %v325 = vld [vmem:[#allocation5 + $0xa4] sm:$0xf]
        %v326 = vld [vmem:[#allocation5 + $0xa8] sm:$0xf]
        %v327 = vld [vmem:[#allocation5 + $0xac] sm:$0xf]
        %v328 = vld [vmem:[#allocation5 + $0xb0] sm:$0xf]
        %v329 = vld [vmem:[#allocation5 + $0xb4] sm:$0xf]
        %v330 = vld [vmem:[#allocation5 + $0xb8] sm:$0xf]
        %v331 = vld [vmem:[#allocation5 + $0xbc] sm:$0xf]
        %v380 = vunpack.c.l.b16 %v284
        %v381 = vunpack.c.l.b16 %v285
        %v382 = vunpack.c.l.b16 %v286
        %v383 = vunpack.c.l.b16 %v287
        %v384 = vunpack.c.l.b16 %v288
        %v385 = vunpack.c.l.b16 %v289
        %v386 = vunpack.c.l.b16 %v290
        %v387 = vunpack.c.l.b16 %v291
        %v388 = vunpack.c.l.b16 %v292
        %v389 = vunpack.c.l.b16 %v293
        %v390 = vunpack.c.l.b16 %v294
        %v391 = vunpack.c.l.b16 %v295
        %v392 = vunpack.c.l.b16 %v296
        %v393 = vunpack.c.l.b16 %v297
        %v394 = vunpack.c.l.b16 %v298
        %v395 = vunpack.c.l.b16 %v299
        %v396 = vunpack.c.l.b16 %v300
        %v397 = vunpack.c.l.b16 %v301
        %v398 = vunpack.c.l.b16 %v302
        %v399 = vunpack.c.l.b16 %v303
        %v400 = vunpack.c.l.b16 %v304
        %v401 = vunpack.c.l.b16 %v305
        %v402 = vunpack.c.l.b16 %v306
        %v403 = vunpack.c.l.b16 %v307
        %v404 = vunpack.c.l.b16 %v308
        %v405 = vunpack.c.l.b16 %v309
        %v406 = vunpack.c.l.b16 %v310
        %v407 = vunpack.c.l.b16 %v311
        %v408 = vunpack.c.l.b16 %v312
        %v409 = vunpack.c.l.b16 %v313
        %v410 = vunpack.c.l.b16 %v314
        %v411 = vunpack.c.l.b16 %v315
        %v412 = vunpack.c.l.b16 %v316
        %v413 = vunpack.c.l.b16 %v317
        %v414 = vunpack.c.l.b16 %v318
        %v415 = vunpack.c.l.b16 %v319
        %v416 = vunpack.c.l.b16 %v320
        %v417 = vunpack.c.l.b16 %v321
        %v418 = vunpack.c.l.b16 %v322
        %v419 = vunpack.c.l.b16 %v323
        %v420 = vunpack.c.l.b16 %v324
        %v421 = vunpack.c.l.b16 %v325
        %v422 = vunpack.c.l.b16 %v326
        %v423 = vunpack.c.l.b16 %v327
        %v424 = vunpack.c.l.b16 %v328
        %v425 = vunpack.c.l.b16 %v329
        %v426 = vunpack.c.l.b16 %v330
        %v427 = vunpack.c.l.b16 %v331
        %v428 = vpack.c.b16 %v381, %v380
        %v429 = vpack.c.b16 %v383, %v382
        %v430 = vpack.c.b16 %v385, %v384
        %v431 = vpack.c.b16 %v387, %v386
        %v432 = vpack.c.b16 %v389, %v388
        %v433 = vpack.c.b16 %v391, %v390
        %v434 = vpack.c.b16 %v393, %v392
        %v435 = vpack.c.b16 %v395, %v394
        %v436 = vpack.c.b16 %v397, %v396
        %v437 = vpack.c.b16 %v399, %v398
        %v438 = vpack.c.b16 %v401, %v400
        %v439 = vpack.c.b16 %v403, %v402
        %v440 = vpack.c.b16 %v405, %v404
        %v441 = vpack.c.b16 %v407, %v406
        %v442 = vpack.c.b16 %v409, %v408
        %v443 = vpack.c.b16 %v411, %v410
        %v444 = vpack.c.b16 %v413, %v412
        %v445 = vpack.c.b16 %v415, %v414
        %v446 = vpack.c.b16 %v417, %v416
        %v447 = vpack.c.b16 %v419, %v418
        %v448 = vpack.c.b16 %v421, %v420
        %v449 = vpack.c.b16 %v423, %v422
        %v450 = vpack.c.b16 %v425, %v424
        %v451 = vpack.c.b16 %v427, %v426
        %476 = vmatprep.subr.bf16.mxu0 0
        %477 = vmatpush1.bf16.msra.mxu0 %v435
        %478 = vmatprep.subr.bf16.mxu0 0
        %479 = vmatpush1.bf16.msra.mxu0 %v434
        %480 = vmatprep.subr.bf16.mxu0 0
        %481 = vmatpush1.bf16.msra.mxu0 %v433
        %482 = vmatprep.subr.bf16.mxu0 0
        %483 = vmatpush1.bf16.msra.mxu0 %v432
        %484 = vmatprep.subr.bf16.mxu0 0
        %485 = vmatpush1.bf16.msra.mxu0 %v431
        %486 = vmatprep.subr.bf16.mxu0 0
        %487 = vmatpush1.bf16.msra.mxu0 %v430
        %488 = vmatprep.subr.bf16.mxu0 0
        %489 = vmatpush1.bf16.msra.mxu0 %v429
        %490 = vmatprep.subr.bf16.mxu0 0
        %491 = vmatpush1.bf16.msra.mxu0 %v428
        %492 = vmatprep.subr.bf16.mxu0 0
        %493 = vmatpush2.bf16.msra.mxu0 %v443
        %494 = vmatprep.subr.bf16.mxu0 0
        %495 = vmatpush2.bf16.msra.mxu0 %v442
        %496 = vmatprep.subr.bf16.mxu0 0
        %497 = vmatpush2.bf16.msra.mxu0 %v441
        %498 = vmatprep.subr.bf16.mxu0 0
        %499 = vmatpush2.bf16.msra.mxu0 %v440
        %500 = vmatprep.subr.bf16.mxu0 0
        %501 = vmatpush2.bf16.msra.mxu0 %v439
        %502 = vmatprep.subr.bf16.mxu0 0
        %503 = vmatpush2.bf16.msra.mxu0 %v438
        %504 = vmatprep.subr.bf16.mxu0 0
        %505 = vmatpush2.bf16.msra.mxu0 %v437
        %506 = vmatprep.subr.bf16.mxu0 0
        %507 = vmatpush2.bf16.msra.mxu0 %v436
        %508 = vmatprep.mubr.bf16.mxu0 %v276
        %509 = vmatmul.mubr.bf16.gmra.mxu0 %v280
        %v510 = vpop.f32.mrf.mxu0
        %v511 = vadd.f32 0.0, %v510
        %v512 = vpop.f32.mrf.mxu0
        %v513 = vpop.f32.mrf.mxu0
        %v514 = vpop.f32.mrf.mxu0
        %515 = vdwg.mxu0
        %516 = vmatprep.subr.bf16.mxu0 0
        %517 = vmatpush1.bf16.msra.mxu0 %v451
        %518 = vmatprep.subr.bf16.mxu0 0
        %519 = vmatpush1.bf16.msra.mxu0 %v450
        %520 = vmatprep.subr.bf16.mxu0 0
        %521 = vmatpush1.bf16.msra.mxu0 %v449
        %522 = vmatprep.subr.bf16.mxu0 0
        %523 = vmatpush1.bf16.msra.mxu0 %v448
        %524 = vmatprep.subr.bf16.mxu0 0
        %525 = vmatpush1.bf16.msra.mxu0 %v447
        %526 = vmatprep.subr.bf16.mxu0 0
        %527 = vmatpush1.bf16.msra.mxu0 %v446
        %528 = vmatprep.subr.bf16.mxu0 0
        %529 = vmatpush1.bf16.msra.mxu0 %v445
        %530 = vmatprep.subr.bf16.mxu0 0
        %531 = vmatpush1.bf16.msra.mxu0 %v444
        %532 = vmatprep.subr.bf16.mxu0 0
        %533 = vmatpush2.bf16.msra.mxu0 0
        %534 = vmatprep.subr.bf16.mxu0 0
        %535 = vmatpush2.bf16.msra.mxu0 0
        %536 = vmatprep.subr.bf16.mxu0 0
        %537 = vmatpush2.bf16.msra.mxu0 0
        %538 = vmatprep.subr.bf16.mxu0 0
        %539 = vmatpush2.bf16.msra.mxu0 0
        %540 = vmatprep.subr.bf16.mxu0 0
        %541 = vmatpush2.bf16.msra.mxu0 0
        %542 = vmatprep.subr.bf16.mxu0 0
        %543 = vmatpush2.bf16.msra.mxu0 0
        %544 = vmatprep.subr.bf16.mxu0 0
        %545 = vmatpush2.bf16.msra.mxu0 0
        %546 = vmatprep.subr.bf16.mxu0 0
        %547 = vmatpush2.bf16.msra.mxu0 0
        %548 = vmatprep.mubr.bf16.mxu0 0
        %549 = vmatmul.mubr.bf16.gmra.mxu0 %v283
        %v550 = vpop.f32.mrf.mxu0
        %v551 = vadd.f32 %v511, %v550
        %v552 = vpop.f32.mrf.mxu0
        %v553 = vpop.f32.mrf.mxu0
        %v554 = vpop.f32.mrf.mxu0
        %555 = vdwg.mxu0
        %v556 = vld [vmem:[%s2] sm:$0x1]
        %v558 = vlaneseq
        %v559 = vshrl.u32 %v558, 7
        %v560 = vsub.s32 0, %v559
        %v561 = vrot.slane %v556, %v560
        %v563 = vadd.f32 %v551, %v561
        %v564 = vmax.f32 %v563, 0.0
        %v565 = vrot.slane %v564, 7
        %v566 = vmul.f32 %v565, %v273
        %v567 = vpack.c.bf16 %v566, %v566
        %v568 = vrot.slane %v564, 1
        %v569 = vmul.f32 %v568, %v275
        %v570 = vpack.c.bf16 %v569, %v569
        %v571 = vpack.c.bf16 %v564, %v564
        %v572 = vld [vmem:[#allocation7] sm:$0xf]
        %v573 = vld [vmem:[#allocation7 + $0x4] sm:$0xf]
        %v574 = vld [vmem:[#allocation7 + $0x8] sm:$0xf]
        %v575 = vld [vmem:[#allocation7 + $0xc] sm:$0xf]
        %v576 = vld [vmem:[#allocation7 + $0x10] sm:$0xf]
        %v577 = vld [vmem:[#allocation7 + $0x14] sm:$0xf]
        %v578 = vld [vmem:[#allocation7 + $0x18] sm:$0xf]
        %v579 = vld [vmem:[#allocation7 + $0x1c] sm:$0xf]
        %v580 = vld [vmem:[#allocation7 + $0x20] sm:$0xf]
        %v581 = vld [vmem:[#allocation7 + $0x24] sm:$0xf]
        %v582 = vld [vmem:[#allocation7 + $0x28] sm:$0xf]
        %v583 = vld [vmem:[#allocation7 + $0x2c] sm:$0xf]
        %v584 = vld [vmem:[#allocation7 + $0x30] sm:$0xf]
        %v585 = vld [vmem:[#allocation7 + $0x34] sm:$0xf]
        %v586 = vld [vmem:[#allocation7 + $0x38] sm:$0xf]
        %v587 = vld [vmem:[#allocation7 + $0x3c] sm:$0xf]
        %v588 = vld [vmem:[#allocation7 + $0x40] sm:$0xf]
        %v589 = vld [vmem:[#allocation7 + $0x44] sm:$0xf]
        %v590 = vld [vmem:[#allocation7 + $0x48] sm:$0xf]
        %v591 = vld [vmem:[#allocation7 + $0x4c] sm:$0xf]
        %v592 = vld [vmem:[#allocation7 + $0x50] sm:$0xf]
        %v593 = vld [vmem:[#allocation7 + $0x54] sm:$0xf]
        %v594 = vld [vmem:[#allocation7 + $0x58] sm:$0xf]
        %v595 = vld [vmem:[#allocation7 + $0x5c] sm:$0xf]
        %v596 = vld [vmem:[#allocation7 + $0x60] sm:$0xf]
        %v597 = vld [vmem:[#allocation7 + $0x64] sm:$0xf]
        %v598 = vld [vmem:[#allocation7 + $0x68] sm:$0xf]
        %v599 = vld [vmem:[#allocation7 + $0x6c] sm:$0xf]
        %v600 = vld [vmem:[#allocation7 + $0x70] sm:$0xf]
        %v601 = vld [vmem:[#allocation7 + $0x74] sm:$0xf]
        %v602 = vld [vmem:[#allocation7 + $0x78] sm:$0xf]
        %v603 = vld [vmem:[#allocation7 + $0x7c] sm:$0xf]
        %v604 = vld [vmem:[#allocation7 + $0x80] sm:$0xf]
        %v605 = vld [vmem:[#allocation7 + $0x84] sm:$0xf]
        %v606 = vld [vmem:[#allocation7 + $0x88] sm:$0xf]
        %v607 = vld [vmem:[#allocation7 + $0x8c] sm:$0xf]
        %v608 = vld [vmem:[#allocation7 + $0x90] sm:$0xf]
        %v609 = vld [vmem:[#allocation7 + $0x94] sm:$0xf]
        %v610 = vld [vmem:[#allocation7 + $0x98] sm:$0xf]
        %v611 = vld [vmem:[#allocation7 + $0x9c] sm:$0xf]
        %v612 = vld [vmem:[#allocation7 + $0xa0] sm:$0xf]
        %v613 = vld [vmem:[#allocation7 + $0xa4] sm:$0xf]
        %v614 = vld [vmem:[#allocation7 + $0xa8] sm:$0xf]
        %v615 = vld [vmem:[#allocation7 + $0xac] sm:$0xf]
        %v616 = vld [vmem:[#allocation7 + $0xb0] sm:$0xf]
        %v617 = vld [vmem:[#allocation7 + $0xb4] sm:$0xf]
        %v618 = vld [vmem:[#allocation7 + $0xb8] sm:$0xf]
        %v619 = vld [vmem:[#allocation7 + $0xbc] sm:$0xf]
        %v668 = vunpack.c.l.b16 %v572
        %v669 = vunpack.c.l.b16 %v573
        %v670 = vunpack.c.l.b16 %v574
        %v671 = vunpack.c.l.b16 %v575
        %v672 = vunpack.c.l.b16 %v576
        %v673 = vunpack.c.l.b16 %v577
        %v674 = vunpack.c.l.b16 %v578
        %v675 = vunpack.c.l.b16 %v579
        %v676 = vunpack.c.l.b16 %v580
        %v677 = vunpack.c.l.b16 %v581
        %v678 = vunpack.c.l.b16 %v582
        %v679 = vunpack.c.l.b16 %v583
        %v680 = vunpack.c.l.b16 %v584
        %v681 = vunpack.c.l.b16 %v585
        %v682 = vunpack.c.l.b16 %v586
        %v683 = vunpack.c.l.b16 %v587
        %v684 = vunpack.c.l.b16 %v588
        %v685 = vunpack.c.l.b16 %v589
        %v686 = vunpack.c.l.b16 %v590
        %v687 = vunpack.c.l.b16 %v591
        %v688 = vunpack.c.l.b16 %v592
        %v689 = vunpack.c.l.b16 %v593
        %v690 = vunpack.c.l.b16 %v594
        %v691 = vunpack.c.l.b16 %v595
        %v692 = vunpack.c.l.b16 %v596
        %v693 = vunpack.c.l.b16 %v597
        %v694 = vunpack.c.l.b16 %v598
        %v695 = vunpack.c.l.b16 %v599
        %v696 = vunpack.c.l.b16 %v600
        %v697 = vunpack.c.l.b16 %v601
        %v698 = vunpack.c.l.b16 %v602
        %v699 = vunpack.c.l.b16 %v603
        %v700 = vunpack.c.l.b16 %v604
        %v701 = vunpack.c.l.b16 %v605
        %v702 = vunpack.c.l.b16 %v606
        %v703 = vunpack.c.l.b16 %v607
        %v704 = vunpack.c.l.b16 %v608
        %v705 = vunpack.c.l.b16 %v609
        %v706 = vunpack.c.l.b16 %v610
        %v707 = vunpack.c.l.b16 %v611
        %v708 = vunpack.c.l.b16 %v612
        %v709 = vunpack.c.l.b16 %v613
        %v710 = vunpack.c.l.b16 %v614
        %v711 = vunpack.c.l.b16 %v615
        %v712 = vunpack.c.l.b16 %v616
        %v713 = vunpack.c.l.b16 %v617
        %v714 = vunpack.c.l.b16 %v618
        %v715 = vunpack.c.l.b16 %v619
        %v716 = vpack.c.b16 %v669, %v668
        %v717 = vpack.c.b16 %v671, %v670
        %v718 = vpack.c.b16 %v673, %v672
        %v719 = vpack.c.b16 %v675, %v674
        %v720 = vpack.c.b16 %v677, %v676
        %v721 = vpack.c.b16 %v679, %v678
        %v722 = vpack.c.b16 %v681, %v680
        %v723 = vpack.c.b16 %v683, %v682
        %v724 = vpack.c.b16 %v685, %v684
        %v725 = vpack.c.b16 %v687, %v686
        %v726 = vpack.c.b16 %v689, %v688
        %v727 = vpack.c.b16 %v691, %v690
        %v728 = vpack.c.b16 %v693, %v692
        %v729 = vpack.c.b16 %v695, %v694
        %v730 = vpack.c.b16 %v697, %v696
        %v731 = vpack.c.b16 %v699, %v698
        %v732 = vpack.c.b16 %v701, %v700
        %v733 = vpack.c.b16 %v703, %v702
        %v734 = vpack.c.b16 %v705, %v704
        %v735 = vpack.c.b16 %v707, %v706
        %v736 = vpack.c.b16 %v709, %v708
        %v737 = vpack.c.b16 %v711, %v710
        %v738 = vpack.c.b16 %v713, %v712
        %v739 = vpack.c.b16 %v715, %v714
        %764 = vmatprep.subr.bf16.mxu0 0
        %765 = vmatpush1.bf16.msra.mxu0 %v723
        %766 = vmatprep.subr.bf16.mxu0 0
        %767 = vmatpush1.bf16.msra.mxu0 %v722
        %768 = vmatprep.subr.bf16.mxu0 0
        %769 = vmatpush1.bf16.msra.mxu0 %v721
        %770 = vmatprep.subr.bf16.mxu0 0
        %771 = vmatpush1.bf16.msra.mxu0 %v720
        %772 = vmatprep.subr.bf16.mxu0 0
        %773 = vmatpush1.bf16.msra.mxu0 %v719
        %774 = vmatprep.subr.bf16.mxu0 0
        %775 = vmatpush1.bf16.msra.mxu0 %v718
        %776 = vmatprep.subr.bf16.mxu0 0
        %777 = vmatpush1.bf16.msra.mxu0 %v717
        %778 = vmatprep.subr.bf16.mxu0 0
        %779 = vmatpush1.bf16.msra.mxu0 %v716
        %780 = vmatprep.subr.bf16.mxu0 0
        %781 = vmatpush2.bf16.msra.mxu0 %v731
        %782 = vmatprep.subr.bf16.mxu0 0
        %783 = vmatpush2.bf16.msra.mxu0 %v730
        %784 = vmatprep.subr.bf16.mxu0 0
        %785 = vmatpush2.bf16.msra.mxu0 %v729
        %786 = vmatprep.subr.bf16.mxu0 0
        %787 = vmatpush2.bf16.msra.mxu0 %v728
        %788 = vmatprep.subr.bf16.mxu0 0
        %789 = vmatpush2.bf16.msra.mxu0 %v727
        %790 = vmatprep.subr.bf16.mxu0 0
        %791 = vmatpush2.bf16.msra.mxu0 %v726
        %792 = vmatprep.subr.bf16.mxu0 0
        %793 = vmatpush2.bf16.msra.mxu0 %v725
        %794 = vmatprep.subr.bf16.mxu0 0
        %795 = vmatpush2.bf16.msra.mxu0 %v724
        %796 = vmatprep.mubr.bf16.mxu0 %v571
        %797 = vmatmul.mubr.bf16.gmra.mxu0 %v567
        %v798 = vpop.f32.mrf.mxu0
        %v799 = vadd.f32 0.0, %v798
        %v800 = vpop.f32.mrf.mxu0
        %v801 = vpop.f32.mrf.mxu0
        %v802 = vpop.f32.mrf.mxu0
        %803 = vdwg.mxu0
        %804 = vmatprep.subr.bf16.mxu0 0
        %805 = vmatpush1.bf16.msra.mxu0 %v739
        %806 = vmatprep.subr.bf16.mxu0 0
        %807 = vmatpush1.bf16.msra.mxu0 %v738
        %808 = vmatprep.subr.bf16.mxu0 0
        %809 = vmatpush1.bf16.msra.mxu0 %v737
        %810 = vmatprep.subr.bf16.mxu0 0
        %811 = vmatpush1.bf16.msra.mxu0 %v736
        %812 = vmatprep.subr.bf16.mxu0 0
        %813 = vmatpush1.bf16.msra.mxu0 %v735
        %814 = vmatprep.subr.bf16.mxu0 0
        %815 = vmatpush1.bf16.msra.mxu0 %v734
        %816 = vmatprep.subr.bf16.mxu0 0
        %817 = vmatpush1.bf16.msra.mxu0 %v733
        %818 = vmatprep.subr.bf16.mxu0 0
        %819 = vmatpush1.bf16.msra.mxu0 %v732
        %820 = vmatprep.subr.bf16.mxu0 0
        %821 = vmatpush2.bf16.msra.mxu0 0
        %822 = vmatprep.subr.bf16.mxu0 0
        %823 = vmatpush2.bf16.msra.mxu0 0
        %824 = vmatprep.subr.bf16.mxu0 0
        %825 = vmatpush2.bf16.msra.mxu0 0
        %826 = vmatprep.subr.bf16.mxu0 0
        %827 = vmatpush2.bf16.msra.mxu0 0
        %828 = vmatprep.subr.bf16.mxu0 0
        %829 = vmatpush2.bf16.msra.mxu0 0
        %830 = vmatprep.subr.bf16.mxu0 0
        %831 = vmatpush2.bf16.msra.mxu0 0
        %832 = vmatprep.subr.bf16.mxu0 0
        %833 = vmatpush2.bf16.msra.mxu0 0
        %834 = vmatprep.subr.bf16.mxu0 0
        %835 = vmatpush2.bf16.msra.mxu0 0
        %836 = vmatprep.mubr.bf16.mxu0 0
        %837 = vmatmul.mubr.bf16.gmra.mxu0 %v570
        %v838 = vpop.f32.mrf.mxu0
        %v839 = vadd.f32 %v799, %v838
        %v840 = vpop.f32.mrf.mxu0
        %v841 = vpop.f32.mrf.mxu0
        %v842 = vpop.f32.mrf.mxu0
        %843 = vdwg.mxu0
        %v844 = vld [vmem:[%s4] sm:$0x1]
        %v846 = vlaneseq
        %v847 = vshrl.u32 %v846, 7
        %v848 = vsub.s32 0, %v847
        %v849 = vrot.slane %v844, %v848
        %v851 = vadd.f32 %v839, %v849
        %v852 = vadd.f32 %v851, %v277
        %v853 = vmax.f32 %v852, 0.0
        %v854 = vpack.c.bf16 %v853, %v853
        %855 = vst [vmem:[%s268] sm:$0xf] %v854
        %s856 = sand.u32 %s141, 1
        %s857 = scalar_lea.sflag [#allocation4], %s856
        %s858 = sand.u32 %s141, 1
        %s859 = smul.addr %s858, 4
        %s860 = scalar_lea.vmem [#allocation8], %s859
        // Predicated region
        $region53: #{tpu_custom_call.1} parent=39 // pred_check
          %p861 = pneg %p151
        $region54: #{tpu_custom_call.1} parent=39 // pred_check_branch
          %863 = sbr.rel (%p861) target = $region56
        $region55: #{tpu_custom_call.1} parent=39 // pred_region
          %s865 = ssub.s32 64, 64
          %866 = vsyncadd %s857, %s865
          %s867 = smul.addr %s23, 64
          %s868 = scalar_lea.hbm %s5, %s867
          %s870 = sshll.u32 %s860, 4
          %s871 = int_to_ptr.vmem [resolvable:$true] %s870
          %873 = dma.vmem_to_hbm [thread:$0]  %s871, 64, %s868, %s857
        $region56: #{tpu_custom_call.1} parent=39 // pred_fallthru
          _
      $region40: #{tpu_custom_call.1} parent=5 // pred_fallthru
        _
      %p874 = scmp.le.s32.totalorder 2, %s18
      // Predicated region
      $region57: #{tpu_custom_call.1} parent=5 // pred_check
        %p875 = pneg %p874
      $region58: #{tpu_custom_call.1} parent=5 // pred_check_branch
        %877 = sbr.rel (%p875) target = $region60
      $region59: #{tpu_custom_call.1} parent=5 // pred_region
        %s878 = ssub.s32 %s18, 2
        // Predicated region
        $region61: #{tpu_custom_call.1} parent=59 // pred_check
          %p879 = pneg %p157
        $region62: #{tpu_custom_call.1} parent=59 // pred_check_branch
          %881 = sbr.rel (%p879) target = $region64
        $region63: #{tpu_custom_call.1} parent=59 // pred_region
          %s882 = sand.u32 %s142, 1
          %s883 = scalar_lea.sflag [#allocation4], %s882
          %s884 = sand.u32 %s142, 1
          %s885 = smul.addr %s884, 4
          %s886 = scalar_lea.vmem [#allocation8], %s885
          %887 = dma.done %s883, 64
        $region64: #{tpu_custom_call.1} parent=59 // pred_fallthru
          _
      $region60: #{tpu_custom_call.1} parent=5 // pred_fallthru
        _
    $region6: #{tpu_custom_call.1} parent=1 // loop_footer
      %s22 = sadd.s32 1, %s18
    $region7: #{tpu_custom_call.1} parent=1 // loop_footer_branch
      %17 = sbr.rel target = $region3
    $region8: #{tpu_custom_call.1} parent=1 // loop_exit
      _
    %888 = vsyncpa [#allocation3], 1
    %s889 = scalar_lea.sflag [#allocation3], 1
    %890 = vsyncpa %s889, 1
    %891 = vsyncpa [#allocation6], 1
    %892 = vsyncpa [#allocation4], 1
    %s893 = scalar_lea.sflag [#allocation4], 1
    %894 = vsyncpa %s893, 1

</llo_original>
